<compile_context>
chip_gen: v7x
topology: tpu7x:2x2x1
jax: 0.10.0
libtpu: 0.0.40
codegen_flags: <defaults>
</compile_context>

<pallas_src>
import functools

import jax
import jax.numpy as jnp
from jax import lax
from jax.experimental import pallas as pl
from jax.experimental.pallas import tpu as pltpu

EPS = 1e-5  # nn.GroupNorm default eps


# ----------------------------------------------------------------------------
# in-kernel helpers (traced Python, operate on refs / values)
# ----------------------------------------------------------------------------
def _build_patches(x_f32, patch_ref, *, H, W):
    """im2col into a bf16 VMEM scratch.

    x_f32:     (Cin, N) float32 slab, N = H*W flattened on the lane axis.
    patch_ref: (9*Cin, N) bf16 scratch; row k*Cin + c holds the (dy, dx) = tap k
               shifted (and zero-padded at the image border) copy of channel c.
    """
    Cin, N = x_f32.shape
    idx = lax.broadcasted_iota(jnp.int32, (Cin, N), 1)
    col = idx % W
    row = idx // W

    k = 0
    for dy in (-1, 0, 1):
        for dx in (-1, 0, 1):
            s = dy * W + dx
            shift = (-s) % N
            if shift == 0:
                shifted = x_f32
            else:
                # shifted[c, n] = x[c, (n + s) mod N]   (lane rotation on XLU)
                shifted = pltpu.roll(x_f32, shift=shift, axis=1)
            # zero out taps that fall outside the image (conv padding=1)
            conds = []
            if dx == -1:
                conds.append(col >= 1)
            if dx == 1:
                conds.append(col <= W - 2)
            if dy == -1:
                conds.append(row >= 1)
            if dy == 1:
                conds.append(row <= H - 2)
            if conds:
                valid = functools.reduce(jnp.logical_and, conds)
                tap = jnp.where(valid, shifted, 0.0)
            else:
                tap = shifted
            patch_ref[k * Cin:(k + 1) * Cin, :] = tap.astype(patch_ref.dtype)
            k += 1


def _conv_gn_act(x_f32, w_ref, b_ref, gamma_ref, beta_ref, A_ref, patch_ref,
                 scale, shift, *, H, W):
    """conv3x3 (bf16 MXU, K = 9*Cin) -> GroupNorm (f32) -> scale_shift -> SiLU."""
    _build_patches(x_f32, patch_ref, H=H, W=W)

    # single deep-contraction matmul: (C, 9*Cin) x (9*Cin, N) -> (C, N)  f32 acc
    h = jnp.dot(w_ref[...], patch_ref[...], preferred_element_type=jnp.float32)
    h = h + b_ref[...]                                   # (C, N) + (C, 1)

    # GroupNorm: A is the block-diagonal group-averaging matrix (/(Cg*N)),
    # precomputed in the wrapper.  Stats stay in f32.
    ga = jnp.dot(A_ref[...], h, preferred_element_type=jnp.float32)
    gq = jnp.dot(A_ref[...], h * h, preferred_element_type=jnp.float32)
    mean_c = jnp.sum(ga, axis=1, keepdims=True)          # (C, 1) group mean
    msq_c = jnp.sum(gq, axis=1, keepdims=True)           # (C, 1) group E[x^2]
    var_c = jnp.maximum(msq_c - mean_c * mean_c, 0.0)    # clamp (review note)
    inv_c = lax.rsqrt(var_c + EPS)

    y = (h - mean_c) * inv_c * gamma_ref[...] + beta_ref[...]
    if scale is not None:
        y = y * (scale + 1.0) + shift                    # time-emb scale_shift
    return y * jax.nn.sigmoid(y)                         # SiLU (f32, EUP)


# ----------------------------------------------------------------------------
# fused ResnetBlock kernels (one grid step per batch element)
# ----------------------------------------------------------------------------
def _resnet_block_res_kernel(x_ref, w1_ref, b1_ref, g1_ref, be1_ref, sc_ref, sh_ref,
                             w2_ref, b2_ref, g2_ref, be2_ref, A_ref, wr_ref, br_ref,
                             o_ref, patch1_ref, patch2_ref, *, H, W):
    x = x_ref[0]                                         # (Cin, N) f32
    h1 = _conv_gn_act(x, w1_ref, b1_ref, g1_ref, be1_ref, A_ref, patch1_ref,
                      sc_ref[0], sh_ref[0], H=H, W=W)
    h2 = _conv_gn_act(h1, w2_ref, b2_ref, g2_ref, be2_ref, A_ref, patch2_ref,
                      None, None, H=H, W=W)
    # fused 1x1 residual conv (bf16 MXU) + add
    res = jnp.dot(wr_ref[...], x.astype(jnp.bfloat16),
                  preferred_element_type=jnp.float32) + br_ref[...]
    o_ref[0] = (h2 + res).astype(o_ref.dtype)


def _resnet_block_id_kernel(x_ref, w1_ref, b1_ref, g1_ref, be1_ref, sc_ref, sh_ref,
                            w2_ref, b2_ref, g2_ref, be2_ref, A_ref,
                            o_ref, patch1_ref, patch2_ref, *, H, W):
    x = x_ref[0]                                         # (C, N) f32, Cin == Cout
    h1 = _conv_gn_act(x, w1_ref, b1_ref, g1_ref, be1_ref, A_ref, patch1_ref,
                      sc_ref[0], sh_ref[0], H=H, W=W)
    h2 = _conv_gn_act(h1, w2_ref, b2_ref, g2_ref, be2_ref, A_ref, patch2_ref,
                      None, None, H=H, W=W)
    o_ref[0] = (h2 + x).astype(o_ref.dtype)              # identity residual


# ----------------------------------------------------------------------------
# time-embedding MLP: SiLU -> Linear (tiny, bf16 MXU operands)
# ----------------------------------------------------------------------------
def _time_mlp_kernel(t_ref, w_ref, b_ref, o_ref):
    t = t_ref[...]
    t = t * jax.nn.sigmoid(t)                            # SiLU in f32
    o_ref[...] = jnp.dot(t.astype(jnp.bfloat16), w_ref[...],
                         preferred_element_type=jnp.float32) + b_ref[...]


def _time_mlp(t, w_bf16, b):
    B, T = t.shape
    O = w_bf16.shape[-1]
    return pl.pallas_call(
        _time_mlp_kernel,
        out_shape=jax.ShapeDtypeStruct((B, O), jnp.float32),
        grid=(1,),
        in_specs=[
            pl.BlockSpec((B, T), lambda i: (0, 0)),
            pl.BlockSpec((T, O), lambda i: (0, 0)),
            pl.BlockSpec((1, O), lambda i: (0, 0)),
        ],
        out_specs=pl.BlockSpec((B, O), lambda i: (0, 0)),
    )(t, w_bf16, b.reshape(1, O))


# ----------------------------------------------------------------------------
# public wrapper: NCHW in / NCHW out (pure reshapes, no transposes)
# ----------------------------------------------------------------------------
def resnet_block_forward(params, x_nchw, time_emb=None, *, groups=8):
    B, Cin, H, W = x_nchw.shape
    N = H * W
    Cout = params["b1"].shape[0]
    assert Cout % groups == 0
    Cg = Cout // groups

    f32, bf16 = jnp.float32, jnp.bfloat16
    x = x_nchw.reshape(B, Cin, N).astype(f32)            # NCHW -> (B, C, H*W)

    # ----- time embedding -> per (batch, channel) scale / shift
    if time_emb is not None and "mlp_w" in params:
        te = _time_mlp(time_emb.astype(f32), params["mlp_w"].astype(bf16),
                       params["mlp_b"].astype(f32))      # (B, 2*Cout)
        scale = te[:, :Cout].reshape(B, Cout, 1)
        shift = te[:, Cout:].reshape(B, Cout, 1)
    else:
        scale = jnp.zeros((B, Cout, 1), f32)
        shift = jnp.zeros((B, Cout, 1), f32)

    # ----- parameter packing (weights in bf16 for the MXU)
    def conv_w(w_oihw):                                  # (O, I, 3, 3) -> (O, 9*I)
        o, c = w_oihw.shape[0], w_oihw.shape[1]
        return w_oihw.transpose(0, 2, 3, 1).reshape(o, 9 * c).astype(bf16)

    def as_col(v):
        return v.reshape(-1, 1).astype(f32)

    w1, w2 = conv_w(params["w1"]), conv_w(params["w2"])
    b1, g1, be1 = as_col(params["b1"]), as_col(params["g1"]), as_col(params["be1"])
    b2, g2, be2 = as_col(params["b2"]), as_col(params["g2"]), as_col(params["be2"])

    # group-averaging matrix A[c, c'] = 1/(Cg*N) if same group else 0 (precomputed)
    ch = jnp.arange(Cout)
    A = ((ch[:, None] // Cg) == (ch[None, :] // Cg)).astype(f32) / float(Cg * N)

    args = [x, w1, b1, g1, be1, scale, shift, w2, b2, g2, be2, A]
    in_specs = [
        pl.BlockSpec((1, Cin, N), lambda b: (b, 0, 0)),        # x
        pl.BlockSpec((Cout, 9 * Cin), lambda b: (0, 0)),       # w1 (bf16)
        pl.BlockSpec((Cout, 1), lambda b: (0, 0)),             # b1
        pl.BlockSpec((Cout, 1), lambda b: (0, 0)),             # gamma1
        pl.BlockSpec((Cout, 1), lambda b: (0, 0)),             # beta1
        pl.BlockSpec((1, Cout, 1), lambda b: (b, 0, 0)),       # scale
        pl.BlockSpec((1, Cout, 1), lambda b: (b, 0, 0)),       # shift
        pl.BlockSpec((Cout, 9 * Cout), lambda b: (0, 0)),      # w2 (bf16)
        pl.BlockSpec((Cout, 1), lambda b: (0, 0)),             # b2
        pl.BlockSpec((Cout, 1), lambda b: (0, 0)),             # gamma2
        pl.BlockSpec((Cout, 1), lambda b: (0, 0)),             # beta2
        pl.BlockSpec((Cout, Cout), lambda b: (0, 0)),          # group-avg matrix
    ]

    if Cin != Cout:
        kern = functools.partial(_resnet_block_res_kernel, H=H, W=W)
        args += [params["wr"].astype(bf16), as_col(params["br"])]
        in_specs += [pl.BlockSpec((Cout, Cin), lambda b: (0, 0)),
                     pl.BlockSpec((Cout, 1), lambda b: (0, 0))]
    else:
        kern = functools.partial(_resnet_block_id_kernel, H=H, W=W)

    out = pl.pallas_call(
        kern,
        out_shape=jax.ShapeDtypeStruct((B, Cout, N), f32),
        grid=(B,),
        in_specs=in_specs,
        out_specs=pl.BlockSpec((1, Cout, N), lambda b: (b, 0, 0)),
        scratch_shapes=[
            pltpu.VMEM((9 * Cin, N), bf16),                    # im2col conv1
            pltpu.VMEM((9 * Cout, N), bf16),                   # im2col conv2
        ],
        compiler_params=pltpu.CompilerParams(
            dimension_semantics=("parallel",),
            vmem_limit_bytes=64 * 1024 * 1024,
        ),
    )(*args)

    return out.reshape(B, Cout, H, W)                     # (B, C, H*W) -> NCHW


# ----------------------------------------------------------------------------
# deterministic synthetic parameters (shapes follow the PyTorch __init__)
# ----------------------------------------------------------------------------
def init_params(key, dim, dim_out, time_emb_dim):
    ks = jax.random.split(key, 12)
    p = {}
    p["w1"] = 0.2 * jax.random.normal(ks[0], (dim_out, dim, 3, 3), jnp.float32)
    p["b1"] = 0.1 * jax.random.normal(ks[1], (dim_out,), jnp.float32)
    p["g1"] = 1.0 + 0.1 * jax.random.normal(ks[2], (dim_out,), jnp.float32)
    p["be1"] = 0.1 * jax.random.normal(ks[3], (dim_out,), jnp.float32)
    p["w2"] = 0.2 * jax.random.normal(ks[4], (dim_out, dim_out, 3, 3), jnp.float32)
    p["b2"] = 0.1 * jax.random.normal(ks[5], (dim_out,), jnp.float32)
    p["g2"] = 1.0 + 0.1 * jax.random.normal(ks[6], (dim_out,), jnp.float32)
    p["be2"] = 0.1 * jax.random.normal(ks[7], (dim_out,), jnp.float32)
    p["mlp_w"] = 0.2 * jax.random.normal(ks[8], (time_emb_dim, 2 * dim_out), jnp.float32)
    p["mlp_b"] = 0.1 * jax.random.normal(ks[9], (2 * dim_out,), jnp.float32)
    if dim != dim_out:
        p["wr"] = 0.2 * jax.random.normal(ks[10], (dim_out, dim), jnp.float32)
        p["br"] = 0.1 * jax.random.normal(ks[11], (dim_out,), jnp.float32)
    return p


# ----------------------------------------------------------------------------
# pure-JAX reference (NCHW, same bf16 matmul-operand policy as the kernel)
# ----------------------------------------------------------------------------
def ref_forward(params, x_nchw, time_emb, *, groups=8):
    f32, bf16 = jnp.float32, jnp.bfloat16
    x = x_nchw.astype(f32)
    Cout = params["b1"].shape[0]

    def conv3x3(h, w, b):
        y = lax.conv_general_dilated(
            h.astype(bf16), w.astype(bf16), (1, 1), "SAME",
            dimension_numbers=("NCHW", "OIHW", "NCHW"),
            preferred_element_type=f32)
        return y + b[None, :, None, None]

    def gn(h, gamma, beta):
        B, C, H, W = h.shape
        hg = h.reshape(B, groups, C // groups, H * W)
        mean = hg.mean(axis=(2, 3), keepdims=True)
        var = ((hg - mean) ** 2).mean(axis=(2, 3), keepdims=True)
        hn = (hg - mean) * lax.rsqrt(var + EPS)
        return (hn.reshape(B, C, H, W) * gamma[None, :, None, None]
                + beta[None, :, None, None])

    te = jax.nn.silu(time_emb.astype(f32))
    te = jnp.dot(te.astype(bf16), params["mlp_w"].astype(bf16),
                 preferred_element_type=f32) + params["mlp_b"]
    scale, shift = te[:, :Cout], te[:, Cout:]

    h = conv3x3(x, params["w1"], params["b1"])
    h = gn(h, params["g1"], params["be1"])
    h = h * (scale[:, :, None, None] + 1.0) + shift[:, :, None, None]
    h = jax.nn.silu(h)
    h = conv3x3(h, params["w2"], params["b2"])
    h = gn(h, params["g2"], params["be2"])
    h = jax.nn.silu(h)

    if params["w1"].shape[1] != Cout:
        res = jnp.einsum("oc,bchw->bohw", params["wr"].astype(bf16),
                         x.astype(bf16), preferred_element_type=f32)
        res = res + params["br"][None, :, None, None]
    else:
        res = x
    return h + res


if __name__ == "__main__":
    B, dim, dim_out = 2, 4, 16
    H = W = 16
    time_emb_dim, groups = 16, 8

    key = jax.random.PRNGKey(0)
    kx, kt, kp = jax.random.split(key, 3)
    x = jax.random.normal(kx, (B, dim, H, W), jnp.float32)      # NCHW like PyTorch
    t = jax.random.normal(kt, (B, time_emb_dim), jnp.float32)
    params = init_params(kp, dim, dim_out, time_emb_dim)

    out = resnet_block_forward(params, x, t, groups=groups)
    out = jax.block_until_ready(out)
    assert out.shape == (B, dim_out, H, W), out.shape

    ref = ref_forward(params, x, t, groups=groups)
    err = float(jnp.max(jnp.abs(out - ref)))
    assert err < 2e-3, f"max abs err too large: {err}"

    print("KERNEL_OK")
</pallas_src>

<mosaic_0001>
module attributes {stable_mosaic.version = 11 : i64} {
  func.func @_time_mlp_kernel(%arg0: i32, %arg1: memref<2x16xf32, #tpu.memory_space<vmem>>, %arg2: memref<16x32xbf16, #tpu.memory_space<vmem>>, %arg3: memref<1x32xf32, #tpu.memory_space<vmem>>, %arg4: memref<2x32xf32, #tpu.memory_space<vmem>>) attributes {dimension_semantics = [#tpu.dimension_semantics<arbitrary>], iteration_bounds = array<i64: 1>, scalar_prefetch = 0 : i64, scratch_operands = 0 : i64, tpu.core_type = #tpu.core_type<tc>, window_params = [{pipeline_mode = #tpu.pipeline_mode<synchronous>, transform_indices = @transform_0, window_bounds = array<i64: 2, 16>}, {pipeline_mode = #tpu.pipeline_mode<synchronous>, transform_indices = @transform_1, window_bounds = array<i64: 16, 32>}, {pipeline_mode = #tpu.pipeline_mode<synchronous>, transform_indices = @transform_2, window_bounds = array<i64: 1, 32>}, {pipeline_mode = #tpu.pipeline_mode<synchronous>, transform_indices = @transform_3, window_bounds = array<i64: 2, 32>}]} {
    %c0 = arith.constant 0 : index
    %c0_0 = arith.constant 0 : index
    %0 = vector.load %arg1[%c0, %c0_0] : memref<2x16xf32, #tpu.memory_space<vmem>>, vector<2x16xf32>
    %1 = arith.negf %0 : vector<2x16xf32>
    %2 = math.exp %1 : vector<2x16xf32>
    %cst = arith.constant 1.000000e+00 : f32
    %3 = vector.broadcast %cst : f32 to vector<2x16xf32>
    %4 = arith.addf %3, %2 : vector<2x16xf32>
    %5 = arith.divf %3, %4 : vector<2x16xf32>
    %6 = arith.mulf %0, %5 : vector<2x16xf32>
    %7 = arith.truncf %6 : vector<2x16xf32> to vector<2x16xbf16>
    %c0_1 = arith.constant 0 : index
    %c0_2 = arith.constant 0 : index
    %8 = vector.load %arg2[%c0_1, %c0_2] : memref<16x32xbf16, #tpu.memory_space<vmem>>, vector<16x32xbf16>
    %cst_3 = arith.constant dense<0.000000e+00> : vector<2x32xf32>
    %9 = tpu.matmul %7, %8, %cst_3 {dimension_numbers = #tpu.dot_dimension_numbers<[1], [0], [0], [1], [0, 0, 1, 1], [], []>} : vector<2x16xbf16>, vector<16x32xbf16>, vector<2x32xf32> -> vector<2x32xf32>
    %c0_4 = arith.constant 0 : index
    %c0_5 = arith.constant 0 : index
    %10 = vector.load %arg3[%c0_4, %c0_5] : memref<1x32xf32, #tpu.memory_space<vmem>>, vector<1x32xf32>
    %11 = vector.broadcast %10 : vector<1x32xf32> to vector<2x32xf32>
    %12 = arith.addf %9, %11 : vector<2x32xf32>
    %c0_6 = arith.constant 0 : index
    %c0_7 = arith.constant 0 : index
    %13 = vector.load %arg4[%c0_6, %c0_7] : memref<2x32xf32, #tpu.memory_space<vmem>>, vector<2x32xf32>
    tpu.vector_store %arg4[%c0_6, %c0_7], %12 {strides = array<i32>} : memref<2x32xf32, #tpu.memory_space<vmem>>, vector<2x32xf32>,
    return
  }
  func.func @transform_0(%arg0: i32) -> (i32, i32) {
    %c0_i32 = arith.constant 0 : i32
    %c0_i32_0 = arith.constant 0 : i32
    %c0_i32_1 = arith.constant 0 : i32
    return %c0_i32, %c0_i32_0 : i32, i32
  }
  func.func @transform_1(%arg0: i32) -> (i32, i32) {
    %c0_i32 = arith.constant 0 : i32
    %c0_i32_0 = arith.constant 0 : i32
    %c0_i32_1 = arith.constant 0 : i32
    return %c0_i32, %c0_i32_0 : i32, i32
  }
  func.func @transform_2(%arg0: i32) -> (i32, i32) {
    %c0_i32 = arith.constant 0 : i32
    %c0_i32_0 = arith.constant 0 : i32
    %c0_i32_1 = arith.constant 0 : i32
    return %c0_i32, %c0_i32_0 : i32, i32
  }
  func.func @transform_3(%arg0: i32) -> (i32, i32) {
    %c0_i32 = arith.constant 0 : i32
    %c0_i32_0 = arith.constant 0 : i32
    %c0_i32_1 = arith.constant 0 : i32
    return %c0_i32, %c0_i32_0 : i32, i32
  }
}

</mosaic_0001>

<llo_original>
// kernel: tpu_custom_call.1
$region0: #{tpu_custom_call.1}
  #allocation0 [shape = 'u32[]', space=smem, size = 0x4, offset = 0x4, fixed_abs, tag = 'smem constant byte address 0x4 - core index']
  #allocation1 [shape = 'u32[144,128]{1,0:T(1,128)}', space=vmem, size = 0x12000, scoped, tag = 'internal scratch']
  %s0 = inlined_call_operand.hbm [shape: f32[2,16], index: 0, kind: input, shape index: {}]
  %s1 = inlined_call_operand.hbm [shape: bf16[16,32], index: 1, kind: input, shape index: {}]
  %s2 = inlined_call_operand.vmem [shape: f32[1,32], index: 2, kind: input, shape index: {}]
  %s3 = inlined_call_operand.hbm [shape: f32[2,32], index: 3, kind: output, shape index: {}]
  %s4 = sld [smem:[#allocation0]]
  $region30: #{tpu_custom_call.1} parent=0
    _
  %s6 = ssub.s32 1, %s4
  %s7 = scalar_select 0, %s6, %s4
  $region1: #{tpu_custom_call.1} parent=0
    #allocation2 [shape = 'u8[1024]{0}', space=vmem, size = 0x400, scoped, tag = 'input window, operand 0, single buffered']
    #allocation3 [shape = 's32[1]{0}', space=sflag, size = 0x4, scoped, tag = 'scoped memory for tpu_custom_call.1']
    #allocation4 [shape = 's32[1]{0}', space=sflag, size = 0x4, scoped, tag = 'scoped memory for tpu_custom_call.1']
    #allocation5 [shape = 'u8[4096]{0}', space=vmem, size = 0x1000, scoped, tag = 'input window, operand 1, single buffered']
    #allocation6 [shape = 's32[1]{0}', space=sflag, size = 0x4, scoped, tag = 'scoped memory for tpu_custom_call.1']
    #allocation7 [shape = 'u8[1024]{0}', space=vmem, size = 0x400, scoped, tag = 'output window, operand 0, single buffered']
    %8 = vsyncpa [#allocation3], 0
    %9 = vsyncpa [#allocation6], 0
    %10 = vsyncpa [#allocation4], 0
    // Predicated region
    $region2: #{tpu_custom_call.1} parent=1 // pred_check
      _
    $region3: #{tpu_custom_call.1} parent=1 // pred_check_branch
      %12 = sbr.rel (0) target = $region5
    $region4: #{tpu_custom_call.1} parent=1 // pred_region
      %s14 = ssub.s32 32, 32
      %15 = vsyncadd [#allocation3], %s14
      %s17 = sshll.u32 [#allocation2], 4
      %s18 = int_to_ptr.vmem [resolvable:$true] %s17
      %20 = dma.hbm_to_vmem [thread:$0]  %s0, 32, %s18, [#allocation3]
    $region5: #{tpu_custom_call.1} parent=1 // pred_fallthru
      _
    // Predicated region
    $region6: #{tpu_custom_call.1} parent=1 // pred_check
      _
    $region7: #{tpu_custom_call.1} parent=1 // pred_check_branch
      %22 = sbr.rel (0) target = $region9
    $region8: #{tpu_custom_call.1} parent=1 // pred_region
      %s24 = ssub.s32 128, 128
      %25 = vsyncadd [#allocation6], %s24
      %s26 = sshll.u32 [#allocation5], 4
      %s27 = int_to_ptr.vmem [resolvable:$true] %s26
      %32 = dma.hbm_to_vmem [thread:$0]  %s1, 128, %s27, [#allocation6], 64, 64, 4
    $region9: #{tpu_custom_call.1} parent=1 // pred_fallthru
      _
    // Predicated region
    $region10: #{tpu_custom_call.1} parent=1 // pred_check
      _
    $region11: #{tpu_custom_call.1} parent=1 // pred_check_branch
      %34 = sbr.rel (0) target = $region13
    $region12: #{tpu_custom_call.1} parent=1 // pred_region
      _
    $region13: #{tpu_custom_call.1} parent=1 // pred_fallthru
      _
    // Predicated region
    $region14: #{tpu_custom_call.1} parent=1 // pred_check
      _
    $region15: #{tpu_custom_call.1} parent=1 // pred_check_branch
      %36 = sbr.rel (0) target = $region17
    $region16: #{tpu_custom_call.1} parent=1 // pred_region
      %37 = dma.done [#allocation3], 32
    $region17: #{tpu_custom_call.1} parent=1 // pred_fallthru
      _
    // Predicated region
    $region18: #{tpu_custom_call.1} parent=1 // pred_check
      _
    $region19: #{tpu_custom_call.1} parent=1 // pred_check_branch
      %39 = sbr.rel (0) target = $region21
    $region20: #{tpu_custom_call.1} parent=1 // pred_region
      %40 = dma.done [#allocation6], 128
    $region21: #{tpu_custom_call.1} parent=1 // pred_fallthru
      _
    %v42 = vld [vmem:[#allocation2] sm:$0x3]
    %v43 = vxor.u32 %v42, 2147483648
    %v44 = vmul.f32 %v43, 1.442695
    %v45 = vpow.pop %v44
    %v46 = vadd.f32 %v45, 1.0
    %v47 = vrcp.pop %v46
    %v48 = vmul.f32 1.0, %v47
    %v49 = vmul.f32 %v42, %v48
    %v50 = vpack.c.bf16 %v49, %v49
    %v51 = vld [vmem:[#allocation5] sm:$0xf]
    %v52 = vld [vmem:[#allocation5 + $0x4] sm:$0xf]
    %v53 = vld [vmem:[%s2] sm:$0x1]
    %v55 = vlaneseq
    %v56 = vshrl.u32 %v55, 7
    %v57 = vsub.s32 0, %v56
    %v58 = vrot.slane %v53, %v57
    %v62 = vunpack.c.l.b16 %v51
    %v63 = vunpack.c.l.b16 %v52
    %v64 = vpack.c.b16 %v63, %v62
    %vm66 = vcmask 130048
    %v68 = vsel %vm66, %v50, 0
    %70 = vmatprep.subr.bf16.mxu0 0
    %71 = vmatpush1.bf16.msra.mxu0 %v64
    %72 = vmatprep.subr.bf16.mxu0 0
    %73 = vmatpush1.bf16.msra.mxu0 0
    %74 = vmatprep.subr.bf16.mxu0 0
    %75 = vmatpush1.bf16.msra.mxu0 0
    %76 = vmatprep.subr.bf16.mxu0 0
    %77 = vmatpush1.bf16.msra.mxu0 0
    %78 = vmatprep.subr.bf16.mxu0 0
    %79 = vmatpush1.bf16.msra.mxu0 0
    %80 = vmatprep.subr.bf16.mxu0 0
    %81 = vmatpush1.bf16.msra.mxu0 0
    %82 = vmatprep.subr.bf16.mxu0 0
    %83 = vmatpush1.bf16.msra.mxu0 0
    %84 = vmatprep.subr.bf16.mxu0 0
    %85 = vmatpush1.bf16.msra.mxu0 0
    %86 = vmatprep.subr.bf16.mxu0 0
    %87 = vmatpush1.bf16.msra.mxu0 0
    %88 = vmatprep.subr.bf16.mxu0 0
    %89 = vmatpush1.bf16.msra.mxu0 0
    %90 = vmatprep.subr.bf16.mxu0 0
    %91 = vmatpush1.bf16.msra.mxu0 0
    %92 = vmatprep.subr.bf16.mxu0 0
    %93 = vmatpush1.bf16.msra.mxu0 0
    %94 = vmatprep.subr.bf16.mxu0 0
    %95 = vmatpush1.bf16.msra.mxu0 0
    %96 = vmatprep.subr.bf16.mxu0 0
    %97 = vmatpush1.bf16.msra.mxu0 0
    %98 = vmatprep.subr.bf16.mxu0 0
    %99 = vmatpush1.bf16.msra.mxu0 0
    %100 = vmatprep.subr.bf16.mxu0 0
    %101 = vmatpush1.bf16.msra.mxu0 0
    %102 = vmatprep.mubr.bf16.mxu0 0
    %103 = vmatmul.mubr.bf16.gmra.mrb[0].mxu0 %v68
    %v104 = vpop.f32.mrb[0].mxu0
    %v105 = vadd.f32 %v58, %v104
    %v106 = vpop.f32.mrb[0].mxu0
    %v107 = vpop.f32.mrb[0].mxu0
    %v108 = vpop.f32.mrb[0].mxu0
    %109 = vdwg.mxu0
    %vm110 = vcmask 254976
    %111 = vst.msk [vmem:[#allocation7] sm:$0x3] %vm110, %v105
    // Predicated region
    $region22: #{tpu_custom_call.1} parent=1 // pred_check
      _
    $region23: #{tpu_custom_call.1} parent=1 // pred_check_branch
      %113 = sbr.rel (0) target = $region25
    $region24: #{tpu_custom_call.1} parent=1 // pred_region
      %s115 = ssub.s32 32, 32
      %116 = vsyncadd [#allocation4], %s115
      %s118 = sshll.u32 [#allocation7], 4
      %s119 = int_to_ptr.vmem [resolvable:$true] %s118
      %121 = dma.vmem_to_hbm [thread:$0]  %s119, 32, %s3, [#allocation4]
    $region25: #{tpu_custom_call.1} parent=1 // pred_fallthru
      _
    // Predicated region
    $region26: #{tpu_custom_call.1} parent=1 // pred_check
      _
    $region27: #{tpu_custom_call.1} parent=1 // pred_check_branch
      %123 = sbr.rel (0) target = $region29
    $region28: #{tpu_custom_call.1} parent=1 // pred_region
      %124 = dma.done [#allocation4], 32
    $region29: #{tpu_custom_call.1} parent=1 // pred_fallthru
      _
    %125 = vsyncpa [#allocation3], 1
    %126 = vsyncpa [#allocation6], 1
    %127 = vsyncpa [#allocation4], 1

</llo_original>
